<compile_context>
chip_gen: v7x
topology: tpu7x:2x2x1
jax: 0.10.0
libtpu: 0.0.40
codegen_flags: <defaults>
</compile_context>

<pallas_src>
import jax
import jax.numpy as jnp
from jax.experimental import pallas as pl
from jax.experimental.pallas import tpu as pltpu


def _round_up(a: int, m: int) -> int:
    return ((a + m - 1) // m) * m


def _sublane(dtype) -> int:
    # rows per (8,128) sublane group: 8 for 32-bit, 16 for bf16, 32 for int8/fp8
    return max(8, 32 // jnp.dtype(dtype).itemsize)


def _nos_fold_kernel(b_ref, x_ref, w_ref, o_ref):
    """o = x @ W_blockdiag + b   (block-diagonal fold of the (N,C)x(C,1) GEMV).

    b_ref: (1,)          SMEM   bias scalar
    x_ref: (TRf, CF)     VMEM   folded row tile (lane-dense, CF multiple of 128)
    w_ref: (CF, fold)    VMEM   block-diagonal weight, resident across the grid
    o_ref: (TRf, fold)   VMEM   f32 output tile
    """
    acc = jnp.dot(
        x_ref[...],
        w_ref[...],
        preferred_element_type=jnp.float32,
        precision=jax.lax.Precision.HIGHEST,
    )
    o_ref[...] = acc + b_ref[0]


def nos_linear(x2, weight, bias, *, target_block_bytes=4 * 1024 * 1024):
    """(N, C) @ weight.T + bias -> (N, 1) float32, via lane-folded MXU dot."""
    N, C = x2.shape

    # Keep floating dtypes as-is (bf16 gets free f32 accumulation on the MXU);
    # anything else is upcast to f32 in the wrapper.
    if not jnp.issubdtype(x2.dtype, jnp.floating):
        x2 = x2.astype(jnp.float32)
    in_dtype = x2.dtype
    itemsize = jnp.dtype(in_dtype).itemsize
    sub = _sublane(in_dtype)

    # Channel padding / fold factor so the folded minor dim is exactly lane-dense.
    if C <= 128:
        cp = max(1, int(pl.next_power_of_2(C)))   # divisor of 128
        fold = 128 // cp
        cfold = 128
    else:
        cp = _round_up(C, 128)
        fold = 1
        cfold = cp

    if cp != C:
        x2 = jnp.pad(x2, ((0, 0), (0, cp - C)))

    w = weight.reshape(-1).astype(jnp.float32)
    if cp != C:
        w = jnp.pad(w, (0, cp - C))
    # Block-diagonal weight: W_bd[k*cp + c, k] = w[c]
    w_bd = jnp.kron(jnp.eye(fold, dtype=jnp.float32), w.reshape(cp, 1))
    w_bd = w_bd.astype(in_dtype)                      # same dtype as x for the MXU dot
    b_vec = bias.reshape(1).astype(jnp.float32)

    # Pad rows so the folded row count is a multiple of the sublane packing.
    row_align = fold * sub
    n_pad = _round_up(max(N, 1), row_align)
    if n_pad != N:
        x2 = jnp.pad(x2, ((0, n_pad - N), (0, 0)))
    n_f = n_pad // fold
    xf = x2.reshape(n_f, cfold)                       # free row-major fold

    # Row tile from the *real* (lane-padded) footprint; small-N -> single step.
    bytes_per_frow = cfold * itemsize
    max_rows = max(sub, (target_block_bytes // bytes_per_frow) // sub * sub)
    if n_f <= max_rows:
        tr_f = n_f
        grid_steps = 1
    else:
        tr_f = max_rows
        grid_steps = pl.cdiv(n_f, tr_f)
    nf_pad = grid_steps * tr_f
    if nf_pad != n_f:
        xf = jnp.pad(xf, ((0, nf_pad - n_f), (0, 0)))

    out = pl.pallas_call(
        _nos_fold_kernel,
        out_shape=jax.ShapeDtypeStruct((nf_pad, fold), jnp.float32),
        grid=(grid_steps,),
        in_specs=[
            pl.BlockSpec(memory_space=pltpu.MemorySpace.SMEM),   # bias scalar
            pl.BlockSpec((tr_f, cfold), lambda i: (i, 0)),       # folded row tile
            pl.BlockSpec((cfold, fold), lambda i: (0, 0)),       # resident weight
        ],
        out_specs=pl.BlockSpec((tr_f, fold), lambda i: (i, 0)),
        compiler_params=pltpu.CompilerParams(
            dimension_semantics=("parallel",)),
    )(b_vec, xf, w_bd)

    # (nf_pad, fold) -> (nf_pad*fold, 1); padded rows are bias-only and sliced off.
    return out.reshape(nf_pad * fold, 1)[:N]


def nos_predictor_forward(x, nos_proposals, weight, bias):
    """JAX/Pallas equivalent of nos_predictor.forward.

    x: (N, C, 1, 1) or (N, C);  weight: (1, C);  bias: (1,)
    nos_proposals: list of per-image proposal arrays (only lengths are used).
    Returns a tuple of per-image nos predictions, each of shape (n_i, 1), f32.
    """
    if x.ndim == 4:
        assert x.shape[2:] == (1, 1), "expected 1x1 spatial (ROI-pooled) features"
    x2 = x.reshape(x.shape[0], -1)
    nos = nos_linear(x2, weight, bias)

    # nos.split(boxes_per_image, dim=0) equivalent (host-side glue, plain JAX).
    boxes_per_image = [len(p) for p in nos_proposals]
    nos_list = []
    start = 0
    for n in boxes_per_image:
        nos_list.append(nos[start:start + n])
        start += n
    return tuple(nos_list)


if __name__ == "__main__":
    key = jax.random.PRNGKey(0)
    kx, kw, kb = jax.random.split(key, 3)

    in_channels = 32
    boxes_per_image = [3, 4]          # N=7: exercises the padding / fold path
    N = sum(boxes_per_image)

    # ROI-head features: (N, C, 1, 1), as asserted by the PyTorch module
    x = jax.random.normal(kx, (N, in_channels, 1, 1), dtype=jnp.float32)

    # Deterministic Linear(in_channels, 1) parameters
    weight = jax.random.normal(kw, (1, in_channels), dtype=jnp.float32) * 0.05
    bias = jax.random.normal(kb, (1,), dtype=jnp.float32)

    # nos_proposals: only the per-image lengths are consumed by forward()
    nos_proposals = [jnp.zeros((n, 4), dtype=jnp.float32) for n in boxes_per_image]

    out = nos_predictor_forward(x, nos_proposals, weight, bias)
    out = jax.block_until_ready(out)

    # Reference check (plain JAX)
    ref = x.reshape(N, -1) @ weight.T + bias
    ref_list = (ref[:boxes_per_image[0]], ref[boxes_per_image[0]:])
    for o, r in zip(out, ref_list):
        assert o.shape == r.shape
        assert jnp.allclose(o, r, atol=1e-5, rtol=1e-5)

    print("KERNEL_OK")
</pallas_src>

<mosaic_0001>
module attributes {stable_mosaic.version = 11 : i64} {
  func.func @_nos_fold_kernel(%arg0: i32, %arg1: memref<1xf32, #tpu.memory_space<smem>>, %arg2: memref<8x128xf32, #tpu.memory_space<vmem>>, %arg3: memref<128x4xf32, #tpu.memory_space<vmem>>, %arg4: memref<8x4xf32, #tpu.memory_space<vmem>>) attributes {dimension_semantics = [#tpu.dimension_semantics<parallel>], iteration_bounds = array<i64: 1>, scalar_prefetch = 0 : i64, scratch_operands = 0 : i64, tpu.core_type = #tpu.core_type<tc>, window_params = [{transform_indices = @transform_0, window_bounds = array<i64: 1>}, {transform_indices = @transform_1, window_bounds = array<i64: 8, 128>}, {pipeline_mode = #tpu.pipeline_mode<synchronous>, transform_indices = @transform_2, window_bounds = array<i64: 128, 4>}, {transform_indices = @transform_3, window_bounds = array<i64: 8, 4>}]} {
    %c0 = arith.constant 0 : index
    %c0_0 = arith.constant 0 : index
    %0 = vector.load %arg2[%c0, %c0_0] : memref<8x128xf32, #tpu.memory_space<vmem>>, vector<8x128xf32>
    %c0_1 = arith.constant 0 : index
    %c0_2 = arith.constant 0 : index
    %1 = vector.load %arg3[%c0_1, %c0_2] : memref<128x4xf32, #tpu.memory_space<vmem>>, vector<128x4xf32>
    %cst = arith.constant dense<0.000000e+00> : vector<8x4xf32>
    %2 = tpu.matmul %0, %1, %cst {dimension_numbers = #tpu.dot_dimension_numbers<[1], [0], [0], [1], [0, 0, 1, 1], [], []>, precision = #tpu.contract_precision<fp32>} : vector<8x128xf32>, vector<128x4xf32>, vector<8x4xf32> -> vector<8x4xf32>
    %c0_3 = arith.constant 0 : index
    %3 = memref.load %arg1[%c0_3] : memref<1xf32, #tpu.memory_space<smem>>
    %4 = vector.broadcast %3 : f32 to vector<8x4xf32>
    %5 = arith.addf %2, %4 : vector<8x4xf32>
    %c0_4 = arith.constant 0 : index
    %c0_5 = arith.constant 0 : index
    %6 = vector.load %arg4[%c0_4, %c0_5] : memref<8x4xf32, #tpu.memory_space<vmem>>, vector<8x4xf32>
    tpu.vector_store %arg4[%c0_4, %c0_5], %5 {strides = array<i32>} : memref<8x4xf32, #tpu.memory_space<vmem>>, vector<8x4xf32>,
    return
  }
  func.func @transform_0(%arg0: i32) -> i32 {
    %c0_i32 = arith.constant 0 : i32
    %c0_i32_0 = arith.constant 0 : i32
    return %c0_i32 : i32
  }
  func.func @transform_1(%arg0: i32) -> (i32, i32) {
    %c0_i32 = arith.constant 0 : i32
    %c0_i32_0 = arith.constant 0 : i32
    return %arg0, %c0_i32 : i32, i32
  }
  func.func @transform_2(%arg0: i32) -> (i32, i32) {
    %c0_i32 = arith.constant 0 : i32
    %c0_i32_0 = arith.constant 0 : i32
    %c0_i32_1 = arith.constant 0 : i32
    return %c0_i32, %c0_i32_0 : i32, i32
  }
  func.func @transform_3(%arg0: i32) -> (i32, i32) {
    %c0_i32 = arith.constant 0 : i32
    %c0_i32_0 = arith.constant 0 : i32
    return %arg0, %c0_i32 : i32, i32
  }
}

</mosaic_0001>

<llo_original>
// kernel: tpu_custom_call.1
$region0: #{tpu_custom_call.1}
  #allocation0 [shape = 'u32[]', space=smem, size = 0x4, offset = 0x4, fixed_abs, tag = 'smem constant byte address 0x4 - core index']
  #allocation1 [shape = 'u32[144,128]{1,0:T(1,128)}', space=vmem, size = 0x12000, scoped, tag = 'internal scratch']
  #allocation2 [shape = 'f32[1]{0:T(128)S(6)}', space=smem, size = 0x200, scoped, tag = 'scoped memory for tpu_custom_call.1']
  %s0 = inlined_call_operand.<no memory space> [shape: f32[1], index: 0, kind: input, shape index: {}]
  %s1 = inlined_call_operand.vmem [shape: f32[8,128], index: 1, kind: input, shape index: {}]
  %s2 = inlined_call_operand.vmem [shape: f32[128,4], index: 2, kind: input, shape index: {}]
  %s3 = inlined_call_operand.vmem [shape: f32[8,4], index: 3, kind: output, shape index: {}]
  %s4 = sld [smem:[#allocation0]]
  $region22: #{tpu_custom_call.1} parent=0
    _
  %s6 = ssub.s32 1, %s4
  %s7 = scalar_select 0, %s6, %s4
  %8 = sst [smem:[#allocation2]] %s0
  // Predicated region
  $region2: #{tpu_custom_call.1} parent=0 // pred_check
    _
  $region3: #{tpu_custom_call.1} parent=0 // pred_check_branch
    %10 = sbr.rel (0) target = $region5
  $region4: #{tpu_custom_call.1} parent=0 // pred_region
    _
  $region5: #{tpu_custom_call.1} parent=0 // pred_fallthru
    _
  // Predicated region
  $region6: #{tpu_custom_call.1} parent=0 // pred_check
    _
  $region7: #{tpu_custom_call.1} parent=0 // pred_check_branch
    %12 = sbr.rel (0) target = $region9
  $region8: #{tpu_custom_call.1} parent=0 // pred_region
    _
  $region9: #{tpu_custom_call.1} parent=0 // pred_fallthru
    _
  // Predicated region
  $region10: #{tpu_custom_call.1} parent=0 // pred_check
    _
  $region11: #{tpu_custom_call.1} parent=0 // pred_check_branch
    %14 = sbr.rel (0) target = $region13
  $region12: #{tpu_custom_call.1} parent=0 // pred_region
    _
  $region13: #{tpu_custom_call.1} parent=0 // pred_fallthru
    _
  %v15 = vld [vmem:[%s1] sm:$0xff]
  %v16 = vld [vmem:[%s2] sm:$0xff]
  %v17 = vld [vmem:[%s2 + $0x8] sm:$0xff]
  %v18 = vld [vmem:[%s2 + $0x10] sm:$0xff]
  %v19 = vld [vmem:[%s2 + $0x18] sm:$0xff]
  %v20 = vld [vmem:[%s2 + $0x20] sm:$0xff]
  %v21 = vld [vmem:[%s2 + $0x28] sm:$0xff]
  %v22 = vld [vmem:[%s2 + $0x30] sm:$0xff]
  %v23 = vld [vmem:[%s2 + $0x38] sm:$0xff]
  %v24 = vld [vmem:[%s2 + $0x40] sm:$0xff]
  %v25 = vld [vmem:[%s2 + $0x48] sm:$0xff]
  %v26 = vld [vmem:[%s2 + $0x50] sm:$0xff]
  %v27 = vld [vmem:[%s2 + $0x58] sm:$0xff]
  %v28 = vld [vmem:[%s2 + $0x60] sm:$0xff]
  %v29 = vld [vmem:[%s2 + $0x68] sm:$0xff]
  %v30 = vld [vmem:[%s2 + $0x70] sm:$0xff]
  %v31 = vld [vmem:[%s2 + $0x78] sm:$0xff]
  %s32 = sld [smem:[#allocation2]]
  %v33 = vstv %s32
  %34 = vmatprep.subr.mxu0 0.0
  %v35 = vand.u32 %v16, 4294901760
  %36 = vmatpush1.msra.mxu0 %v35
  %37 = vmatprep.subr.mxu0 0.0
  %v38 = vand.u32 %v17, 4294901760
  %39 = vmatpush1.msra.mxu0 %v38
  %40 = vmatprep.subr.mxu0 0.0
  %v41 = vand.u32 %v18, 4294901760
  %42 = vmatpush1.msra.mxu0 %v41
  %43 = vmatprep.subr.mxu0 0.0
  %v44 = vand.u32 %v19, 4294901760
  %45 = vmatpush1.msra.mxu0 %v44
  %46 = vmatprep.subr.mxu0 0.0
  %v47 = vand.u32 %v20, 4294901760
  %48 = vmatpush1.msra.mxu0 %v47
  %49 = vmatprep.subr.mxu0 0.0
  %v50 = vand.u32 %v21, 4294901760
  %51 = vmatpush1.msra.mxu0 %v50
  %52 = vmatprep.subr.mxu0 0.0
  %v53 = vand.u32 %v22, 4294901760
  %54 = vmatpush1.msra.mxu0 %v53
  %55 = vmatprep.subr.mxu0 0.0
  %v56 = vand.u32 %v23, 4294901760
  %57 = vmatpush1.msra.mxu0 %v56
  %58 = vmatprep.subr.mxu0 0.0
  %v59 = vand.u32 %v24, 4294901760
  %60 = vmatpush1.msra.mxu0 %v59
  %61 = vmatprep.subr.mxu0 0.0
  %v62 = vand.u32 %v25, 4294901760
  %63 = vmatpush1.msra.mxu0 %v62
  %64 = vmatprep.subr.mxu0 0.0
  %v65 = vand.u32 %v26, 4294901760
  %66 = vmatpush1.msra.mxu0 %v65
  %67 = vmatprep.subr.mxu0 0.0
  %v68 = vand.u32 %v27, 4294901760
  %69 = vmatpush1.msra.mxu0 %v68
  %70 = vmatprep.subr.mxu0 0.0
  %v71 = vand.u32 %v28, 4294901760
  %72 = vmatpush1.msra.mxu0 %v71
  %73 = vmatprep.subr.mxu0 0.0
  %v74 = vand.u32 %v29, 4294901760
  %75 = vmatpush1.msra.mxu0 %v74
  %76 = vmatprep.subr.mxu0 0.0
  %v77 = vand.u32 %v30, 4294901760
  %78 = vmatpush1.msra.mxu0 %v77
  %79 = vmatprep.subr.mxu0 0.0
  %v80 = vand.u32 %v31, 4294901760
  %81 = vmatpush1.msra.mxu0 %v80
  %82 = vmatprep.subr.mxu0 0.0
  %83 = vmatpush1.msra.mxu0 0.0
  %84 = vmatprep.subr.mxu0 0.0
  %85 = vmatpush1.msra.mxu0 0.0
  %86 = vmatprep.subr.mxu0 0.0
  %87 = vmatpush1.msra.mxu0 0.0
  %88 = vmatprep.subr.mxu0 0.0
  %89 = vmatpush1.msra.mxu0 0.0
  %90 = vmatprep.subr.mxu0 0.0
  %91 = vmatpush1.msra.mxu0 0.0
  %92 = vmatprep.subr.mxu0 0.0
  %93 = vmatpush1.msra.mxu0 0.0
  %94 = vmatprep.subr.mxu0 0.0
  %95 = vmatpush1.msra.mxu0 0.0
  %96 = vmatprep.subr.mxu0 0.0
  %97 = vmatpush1.msra.mxu0 0.0
  %98 = vmatprep.subr.mxu0 0.0
  %99 = vmatpush1.msra.mxu0 0.0
  %100 = vmatprep.subr.mxu0 0.0
  %101 = vmatpush1.msra.mxu0 0.0
  %102 = vmatprep.subr.mxu0 0.0
  %103 = vmatpush1.msra.mxu0 0.0
  %104 = vmatprep.subr.mxu0 0.0
  %105 = vmatpush1.msra.mxu0 0.0
  %106 = vmatprep.subr.mxu0 0.0
  %107 = vmatpush1.msra.mxu0 0.0
  %108 = vmatprep.subr.mxu0 0.0
  %109 = vmatpush1.msra.mxu0 0.0
  %110 = vmatprep.subr.mxu0 0.0
  %111 = vmatpush1.msra.mxu0 0.0
  %112 = vmatprep.subr.mxu0 0.0
  %113 = vmatpush1.msra.mxu0 0.0
  %114 = vmatprep.mubr.f32.mxu0 0.0
  %v115 = vand.u32 %v15, 4294901760
  %v116 = vsub.f32 %v15, %v115
  %v117 = vand.u32 %v116, 4294901760
  %v118 = vsub.f32 %v116, %v117
  %v119 = vand.u32 %v118, 4294901760
  %120 = vmatmul.mubr.f32.gmra.mrb[0].mxu0 %v119
  %v121 = vpop.f32.mrb[0].mxu0
  %v122 = vadd.f32 %v33, %v121
  %v123 = vpop.f32.mrb[0].mxu0
  %124 = vdwg.mxu0
  %125 = vmatprep.subr.mxu0 0.0
  %v126 = vand.u32 %v16, 4294901760
  %v127 = vsub.f32 %v16, %v126
  %v128 = vand.u32 %v127, 4294901760
  %v129 = vsub.f32 %v127, %v128
  %v130 = vand.u32 %v129, 4294901760
  %131 = vmatpush1.msra.mxu0 %v130
  %132 = vmatprep.subr.mxu0 0.0
  %v133 = vand.u32 %v17, 4294901760
  %v134 = vsub.f32 %v17, %v133
  %v135 = vand.u32 %v134, 4294901760
  %v136 = vsub.f32 %v134, %v135
  %v137 = vand.u32 %v136, 4294901760
  %138 = vmatpush1.msra.mxu0 %v137
  %139 = vmatprep.subr.mxu0 0.0
  %v140 = vand.u32 %v18, 4294901760
  %v141 = vsub.f32 %v18, %v140
  %v142 = vand.u32 %v141, 4294901760
  %v143 = vsub.f32 %v141, %v142
  %v144 = vand.u32 %v143, 4294901760
  %145 = vmatpush1.msra.mxu0 %v144
  %146 = vmatprep.subr.mxu0 0.0
  %v147 = vand.u32 %v19, 4294901760
  %v148 = vsub.f32 %v19, %v147
  %v149 = vand.u32 %v148, 4294901760
  %v150 = vsub.f32 %v148, %v149
  %v151 = vand.u32 %v150, 4294901760
  %152 = vmatpush1.msra.mxu0 %v151
  %153 = vmatprep.subr.mxu0 0.0
  %v154 = vand.u32 %v20, 4294901760
  %v155 = vsub.f32 %v20, %v154
  %v156 = vand.u32 %v155, 4294901760
  %v157 = vsub.f32 %v155, %v156
  %v158 = vand.u32 %v157, 4294901760
  %159 = vmatpush1.msra.mxu0 %v158
  %160 = vmatprep.subr.mxu0 0.0
  %v161 = vand.u32 %v21, 4294901760
  %v162 = vsub.f32 %v21, %v161
  %v163 = vand.u32 %v162, 4294901760
  %v164 = vsub.f32 %v162, %v163
  %v165 = vand.u32 %v164, 4294901760
  %166 = vmatpush1.msra.mxu0 %v165
  %167 = vmatprep.subr.mxu0 0.0
  %v168 = vand.u32 %v22, 4294901760
  %v169 = vsub.f32 %v22, %v168
  %v170 = vand.u32 %v169, 4294901760
  %v171 = vsub.f32 %v169, %v170
  %v172 = vand.u32 %v171, 4294901760
  %173 = vmatpush1.msra.mxu0 %v172
  %174 = vmatprep.subr.mxu0 0.0
  %v175 = vand.u32 %v23, 4294901760
  %v176 = vsub.f32 %v23, %v175
  %v177 = vand.u32 %v176, 4294901760
  %v178 = vsub.f32 %v176, %v177
  %v179 = vand.u32 %v178, 4294901760
  %180 = vmatpush1.msra.mxu0 %v179
  %181 = vmatprep.subr.mxu0 0.0
  %v182 = vand.u32 %v24, 4294901760
  %v183 = vsub.f32 %v24, %v182
  %v184 = vand.u32 %v183, 4294901760
  %v185 = vsub.f32 %v183, %v184
  %v186 = vand.u32 %v185, 4294901760
  %187 = vmatpush1.msra.mxu0 %v186
  %188 = vmatprep.subr.mxu0 0.0
  %v189 = vand.u32 %v25, 4294901760
  %v190 = vsub.f32 %v25, %v189
  %v191 = vand.u32 %v190, 4294901760
  %v192 = vsub.f32 %v190, %v191
  %v193 = vand.u32 %v192, 4294901760
  %194 = vmatpush1.msra.mxu0 %v193
  %195 = vmatprep.subr.mxu0 0.0
  %v196 = vand.u32 %v26, 4294901760
  %v197 = vsub.f32 %v26, %v196
  %v198 = vand.u32 %v197, 4294901760
  %v199 = vsub.f32 %v197, %v198
  %v200 = vand.u32 %v199, 4294901760
  %201 = vmatpush1.msra.mxu0 %v200
  %202 = vmatprep.subr.mxu0 0.0
  %v203 = vand.u32 %v27, 4294901760
  %v204 = vsub.f32 %v27, %v203
  %v205 = vand.u32 %v204, 4294901760
  %v206 = vsub.f32 %v204, %v205
  %v207 = vand.u32 %v206, 4294901760
  %208 = vmatpush1.msra.mxu0 %v207
  %209 = vmatprep.subr.mxu0 0.0
  %v210 = vand.u32 %v28, 4294901760
  %v211 = vsub.f32 %v28, %v210
  %v212 = vand.u32 %v211, 4294901760
  %v213 = vsub.f32 %v211, %v212
  %v214 = vand.u32 %v213, 4294901760
  %215 = vmatpush1.msra.mxu0 %v214
  %216 = vmatprep.subr.mxu0 0.0
  %v217 = vand.u32 %v29, 4294901760
  %v218 = vsub.f32 %v29, %v217
  %v219 = vand.u32 %v218, 4294901760
  %v220 = vsub.f32 %v218, %v219
  %v221 = vand.u32 %v220, 4294901760
  %222 = vmatpush1.msra.mxu0 %v221
  %223 = vmatprep.subr.mxu0 0.0
  %v224 = vand.u32 %v30, 4294901760
  %v225 = vsub.f32 %v30, %v224
  %v226 = vand.u32 %v225, 4294901760
  %v227 = vsub.f32 %v225, %v226
  %v228 = vand.u32 %v227, 4294901760
  %229 = vmatpush1.msra.mxu0 %v228
  %230 = vmatprep.subr.mxu0 0.0
  %v231 = vand.u32 %v31, 4294901760
  %v232 = vsub.f32 %v31, %v231
  %v233 = vand.u32 %v232, 4294901760
  %v234 = vsub.f32 %v232, %v233
  %v235 = vand.u32 %v234, 4294901760
  %236 = vmatpush1.msra.mxu0 %v235
  %237 = vmatprep.subr.mxu0 0.0
  %238 = vmatpush1.msra.mxu0 0.0
  %239 = vmatprep.subr.mxu0 0.0
  %240 = vmatpush1.msra.mxu0 0.0
  %241 = vmatprep.subr.mxu0 0.0
  %242 = vmatpush1.msra.mxu0 0.0
  %243 = vmatprep.subr.mxu0 0.0
  %244 = vmatpush1.msra.mxu0 0.0
  %245 = vmatprep.subr.mxu0 0.0
  %246 = vmatpush1.msra.mxu0 0.0
  %247 = vmatprep.subr.mxu0 0.0
  %248 = vmatpush1.msra.mxu0 0.0
  %249 = vmatprep.subr.mxu0 0.0
  %250 = vmatpush1.msra.mxu0 0.0
  %251 = vmatprep.subr.mxu0 0.0
  %252 = vmatpush1.msra.mxu0 0.0
  %253 = vmatprep.subr.mxu0 0.0
  %254 = vmatpush1.msra.mxu0 0.0
  %255 = vmatprep.subr.mxu0 0.0
  %256 = vmatpush1.msra.mxu0 0.0
  %257 = vmatprep.subr.mxu0 0.0
  %258 = vmatpush1.msra.mxu0 0.0
  %259 = vmatprep.subr.mxu0 0.0
  %260 = vmatpush1.msra.mxu0 0.0
  %261 = vmatprep.subr.mxu0 0.0
  %262 = vmatpush1.msra.mxu0 0.0
  %263 = vmatprep.subr.mxu0 0.0
  %264 = vmatpush1.msra.mxu0 0.0
  %265 = vmatprep.subr.mxu0 0.0
  %266 = vmatpush1.msra.mxu0 0.0
  %267 = vmatprep.subr.mxu0 0.0
  %268 = vmatpush1.msra.mxu0 0.0
  %269 = vmatprep.mubr.f32.mxu0 0.0
  %v270 = vand.u32 %v15, 4294901760
  %271 = vmatmul.mubr.f32.gmra.mrb[0].mxu0 %v270
  %v272 = vpop.f32.mrb[0].mxu0
  %v273 = vadd.f32 %v122, %v272
  %v274 = vpop.f32.mrb[0].mxu0
  %275 = vdwg.mxu0
  %276 = vmatprep.subr.mxu0 0.0
  %v277 = vand.u32 %v16, 4294901760
  %v278 = vsub.f32 %v16, %v277
  %279 = vmatpush1.msra.mxu0 %v278
  %280 = vmatprep.subr.mxu0 0.0
  %v281 = vand.u32 %v17, 4294901760
  %v282 = vsub.f32 %v17, %v281
  %283 = vmatpush1.msra.mxu0 %v282
  %284 = vmatprep.subr.mxu0 0.0
  %v285 = vand.u32 %v18, 4294901760
  %v286 = vsub.f32 %v18, %v285
  %287 = vmatpush1.msra.mxu0 %v286
  %288 = vmatprep.subr.mxu0 0.0
  %v289 = vand.u32 %v19, 4294901760
  %v290 = vsub.f32 %v19, %v289
  %291 = vmatpush1.msra.mxu0 %v290
  %292 = vmatprep.subr.mxu0 0.0
  %v293 = vand.u32 %v20, 4294901760
  %v294 = vsub.f32 %v20, %v293
  %295 = vmatpush1.msra.mxu0 %v294
  %296 = vmatprep.subr.mxu0 0.0
  %v297 = vand.u32 %v21, 4294901760
  %v298 = vsub.f32 %v21, %v297
  %299 = vmatpush1.msra.mxu0 %v298
  %300 = vmatprep.subr.mxu0 0.0
  %v301 = vand.u32 %v22, 4294901760
  %v302 = vsub.f32 %v22, %v301
  %303 = vmatpush1.msra.mxu0 %v302
  %304 = vmatprep.subr.mxu0 0.0
  %v305 = vand.u32 %v23, 4294901760
  %v306 = vsub.f32 %v23, %v305
  %307 = vmatpush1.msra.mxu0 %v306
  %308 = vmatprep.subr.mxu0 0.0
  %v309 = vand.u32 %v24, 4294901760
  %v310 = vsub.f32 %v24, %v309
  %311 = vmatpush1.msra.mxu0 %v310
  %312 = vmatprep.subr.mxu0 0.0
  %v313 = vand.u32 %v25, 4294901760
  %v314 = vsub.f32 %v25, %v313
  %315 = vmatpush1.msra.mxu0 %v314
  %316 = vmatprep.subr.mxu0 0.0
  %v317 = vand.u32 %v26, 4294901760
  %v318 = vsub.f32 %v26, %v317
  %319 = vmatpush1.msra.mxu0 %v318
  %320 = vmatprep.subr.mxu0 0.0
  %v321 = vand.u32 %v27, 4294901760
  %v322 = vsub.f32 %v27, %v321
  %323 = vmatpush1.msra.mxu0 %v322
  %324 = vmatprep.subr.mxu0 0.0
  %v325 = vand.u32 %v28, 4294901760
  %v326 = vsub.f32 %v28, %v325
  %327 = vmatpush1.msra.mxu0 %v326
  %328 = vmatprep.subr.mxu0 0.0
  %v329 = vand.u32 %v29, 4294901760
  %v330 = vsub.f32 %v29, %v329
  %331 = vmatpush1.msra.mxu0 %v330
  %332 = vmatprep.subr.mxu0 0.0
  %v333 = vand.u32 %v30, 4294901760
  %v334 = vsub.f32 %v30, %v333
  %335 = vmatpush1.msra.mxu0 %v334
  %336 = vmatprep.subr.mxu0 0.0
  %v337 = vand.u32 %v31, 4294901760
  %v338 = vsub.f32 %v31, %v337
  %339 = vmatpush1.msra.mxu0 %v338
  %340 = vmatprep.subr.mxu0 0.0
  %341 = vmatpush1.msra.mxu0 0.0
  %342 = vmatprep.subr.mxu0 0.0
  %343 = vmatpush1.msra.mxu0 0.0
  %344 = vmatprep.subr.mxu0 0.0
  %345 = vmatpush1.msra.mxu0 0.0
  %346 = vmatprep.subr.mxu0 0.0
  %347 = vmatpush1.msra.mxu0 0.0
  %348 = vmatprep.subr.mxu0 0.0
  %349 = vmatpush1.msra.mxu0 0.0
  %350 = vmatprep.subr.mxu0 0.0
  %351 = vmatpush1.msra.mxu0 0.0
  %352 = vmatprep.subr.mxu0 0.0
  %353 = vmatpush1.msra.mxu0 0.0
  %354 = vmatprep.subr.mxu0 0.0
  %355 = vmatpush1.msra.mxu0 0.0
  %356 = vmatprep.subr.mxu0 0.0
  %357 = vmatpush1.msra.mxu0 0.0
  %358 = vmatprep.subr.mxu0 0.0
  %359 = vmatpush1.msra.mxu0 0.0
  %360 = vmatprep.subr.mxu0 0.0
  %361 = vmatpush1.msra.mxu0 0.0
  %362 = vmatprep.subr.mxu0 0.0
  %363 = vmatpush1.msra.mxu0 0.0
  %364 = vmatprep.subr.mxu0 0.0
  %365 = vmatpush1.msra.mxu0 0.0
  %366 = vmatprep.subr.mxu0 0.0
  %367 = vmatpush1.msra.mxu0 0.0
  %368 = vmatprep.subr.mxu0 0.0
  %369 = vmatpush1.msra.mxu0 0.0
  %370 = vmatprep.subr.mxu0 0.0
  %371 = vmatpush1.msra.mxu0 0.0
  %372 = vmatprep.mubr.f32.mxu0 0.0
  %v373 = vand.u32 %v15, 4294901760
  %v374 = vsub.f32 %v15, %v373
  %375 = vmatmul.mubr.f32.gmra.mrb[0].mxu0 %v374
  %v376 = vpop.f32.mrb[0].mxu0
  %v377 = vadd.f32 %v273, %v376
  %v378 = vpop.f32.mrb[0].mxu0
  %379 = vdwg.mxu0
  %380 = vmatprep.subr.mxu0 0.0
  %v381 = vand.u32 %v16, 4294901760
  %382 = vmatpush1.msra.mxu0 %v381
  %383 = vmatprep.subr.mxu0 0.0
  %v384 = vand.u32 %v17, 4294901760
  %385 = vmatpush1.msra.mxu0 %v384
  %386 = vmatprep.subr.mxu0 0.0
  %v387 = vand.u32 %v18, 4294901760
  %388 = vmatpush1.msra.mxu0 %v387
  %389 = vmatprep.subr.mxu0 0.0
  %v390 = vand.u32 %v19, 4294901760
  %391 = vmatpush1.msra.mxu0 %v390
  %392 = vmatprep.subr.mxu0 0.0
  %v393 = vand.u32 %v20, 4294901760
  %394 = vmatpush1.msra.mxu0 %v393
  %395 = vmatprep.subr.mxu0 0.0
  %v396 = vand.u32 %v21, 4294901760
  %397 = vmatpush1.msra.mxu0 %v396
  %398 = vmatprep.subr.mxu0 0.0
  %v399 = vand.u32 %v22, 4294901760
  %400 = vmatpush1.msra.mxu0 %v399
  %401 = vmatprep.subr.mxu0 0.0
  %v402 = vand.u32 %v23, 4294901760
  %403 = vmatpush1.msra.mxu0 %v402
  %404 = vmatprep.subr.mxu0 0.0
  %v405 = vand.u32 %v24, 4294901760
  %406 = vmatpush1.msra.mxu0 %v405
  %407 = vmatprep.subr.mxu0 0.0
  %v408 = vand.u32 %v25, 4294901760
  %409 = vmatpush1.msra.mxu0 %v408
  %410 = vmatprep.subr.mxu0 0.0
  %v411 = vand.u32 %v26, 4294901760
  %412 = vmatpush1.msra.mxu0 %v411
  %413 = vmatprep.subr.mxu0 0.0
  %v414 = vand.u32 %v27, 4294901760
  %415 = vmatpush1.msra.mxu0 %v414
  %416 = vmatprep.subr.mxu0 0.0
  %v417 = vand.u32 %v28, 4294901760
  %418 = vmatpush1.msra.mxu0 %v417
  %419 = vmatprep.subr.mxu0 0.0
  %v420 = vand.u32 %v29, 4294901760
  %421 = vmatpush1.msra.mxu0 %v420
  %422 = vmatprep.subr.mxu0 0.0
  %v423 = vand.u32 %v30, 4294901760
  %424 = vmatpush1.msra.mxu0 %v423
  %425 = vmatprep.subr.mxu0 0.0
  %v426 = vand.u32 %v31, 4294901760
  %427 = vmatpush1.msra.mxu0 %v426
  %428 = vmatprep.subr.mxu0 0.0
  %429 = vmatpush1.msra.mxu0 0.0
  %430 = vmatprep.subr.mxu0 0.0
  %431 = vmatpush1.msra.mxu0 0.0
  %432 = vmatprep.subr.mxu0 0.0
  %433 = vmatpush1.msra.mxu0 0.0
  %434 = vmatprep.subr.mxu0 0.0
  %435 = vmatpush1.msra.mxu0 0.0
  %436 = vmatprep.subr.mxu0 0.0
  %437 = vmatpush1.msra.mxu0 0.0
  %438 = vmatprep.subr.mxu0 0.0
  %439 = vmatpush1.msra.mxu0 0.0
  %440 = vmatprep.subr.mxu0 0.0
  %441 = vmatpush1.msra.mxu0 0.0
  %442 = vmatprep.subr.mxu0 0.0
  %443 = vmatpush1.msra.mxu0 0.0
  %444 = vmatprep.subr.mxu0 0.0
  %445 = vmatpush1.msra.mxu0 0.0
  %446 = vmatprep.subr.mxu0 0.0
  %447 = vmatpush1.msra.mxu0 0.0
  %448 = vmatprep.subr.mxu0 0.0
  %449 = vmatpush1.msra.mxu0 0.0
  %450 = vmatprep.subr.mxu0 0.0
  %451 = vmatpush1.msra.mxu0 0.0
  %452 = vmatprep.subr.mxu0 0.0
  %453 = vmatpush1.msra.mxu0 0.0
  %454 = vmatprep.subr.mxu0 0.0
  %455 = vmatpush1.msra.mxu0 0.0
  %456 = vmatprep.subr.mxu0 0.0
  %457 = vmatpush1.msra.mxu0 0.0
  %458 = vmatprep.subr.mxu0 0.0
  %459 = vmatpush1.msra.mxu0 0.0
  %460 = vmatprep.mubr.f32.mxu0 0.0
  %v461 = vand.u32 %v15, 4294901760
  %v462 = vsub.f32 %v15, %v461
  %v463 = vand.u32 %v462, 4294901760
  %464 = vmatmul.mubr.f32.gmra.mrb[0].mxu0 %v463
  %v465 = vpop.f32.mrb[0].mxu0
  %v466 = vadd.f32 %v377, %v465
  %v467 = vpop.f32.mrb[0].mxu0
  %468 = vdwg.mxu0
  %469 = vmatprep.subr.mxu0 0.0
  %v470 = vand.u32 %v16, 4294901760
  %v471 = vsub.f32 %v16, %v470
  %v472 = vand.u32 %v471, 4294901760
  %473 = vmatpush1.msra.mxu0 %v472
  %474 = vmatprep.subr.mxu0 0.0
  %v475 = vand.u32 %v17, 4294901760
  %v476 = vsub.f32 %v17, %v475
  %v477 = vand.u32 %v476, 4294901760
  %478 = vmatpush1.msra.mxu0 %v477
  %479 = vmatprep.subr.mxu0 0.0
  %v480 = vand.u32 %v18, 4294901760
  %v481 = vsub.f32 %v18, %v480
  %v482 = vand.u32 %v481, 4294901760
  %483 = vmatpush1.msra.mxu0 %v482
  %484 = vmatprep.subr.mxu0 0.0
  %v485 = vand.u32 %v19, 4294901760
  %v486 = vsub.f32 %v19, %v485
  %v487 = vand.u32 %v486, 4294901760
  %488 = vmatpush1.msra.mxu0 %v487
  %489 = vmatprep.subr.mxu0 0.0
  %v490 = vand.u32 %v20, 4294901760
  %v491 = vsub.f32 %v20, %v490
  %v492 = vand.u32 %v491, 4294901760
  %493 = vmatpush1.msra.mxu0 %v492
  %494 = vmatprep.subr.mxu0 0.0
  %v495 = vand.u32 %v21, 4294901760
  %v496 = vsub.f32 %v21, %v495
  %v497 = vand.u32 %v496, 4294901760
  %498 = vmatpush1.msra.mxu0 %v497
  %499 = vmatprep.subr.mxu0 0.0
  %v500 = vand.u32 %v22, 4294901760
  %v501 = vsub.f32 %v22, %v500
  %v502 = vand.u32 %v501, 4294901760
  %503 = vmatpush1.msra.mxu0 %v502
  %504 = vmatprep.subr.mxu0 0.0
  %v505 = vand.u32 %v23, 4294901760
  %v506 = vsub.f32 %v23, %v505
  %v507 = vand.u32 %v506, 4294901760
  %508 = vmatpush1.msra.mxu0 %v507
  %509 = vmatprep.subr.mxu0 0.0
  %v510 = vand.u32 %v24, 4294901760
  %v511 = vsub.f32 %v24, %v510
  %v512 = vand.u32 %v511, 4294901760
  %513 = vmatpush1.msra.mxu0 %v512
  %514 = vmatprep.subr.mxu0 0.0
  %v515 = vand.u32 %v25, 4294901760
  %v516 = vsub.f32 %v25, %v515
  %v517 = vand.u32 %v516, 4294901760
  %518 = vmatpush1.msra.mxu0 %v517
  %519 = vmatprep.subr.mxu0 0.0
  %v520 = vand.u32 %v26, 4294901760
  %v521 = vsub.f32 %v26, %v520
  %v522 = vand.u32 %v521, 4294901760
  %523 = vmatpush1.msra.mxu0 %v522
  %524 = vmatprep.subr.mxu0 0.0
  %v525 = vand.u32 %v27, 4294901760
  %v526 = vsub.f32 %v27, %v525
  %v527 = vand.u32 %v526, 4294901760
  %528 = vmatpush1.msra.mxu0 %v527
  %529 = vmatprep.subr.mxu0 0.0
  %v530 = vand.u32 %v28, 4294901760
  %v531 = vsub.f32 %v28, %v530
  %v532 = vand.u32 %v531, 4294901760
  %533 = vmatpush1.msra.mxu0 %v532
  %534 = vmatprep.subr.mxu0 0.0
  %v535 = vand.u32 %v29, 4294901760
  %v536 = vsub.f32 %v29, %v535
  %v537 = vand.u32 %v536, 4294901760
  %538 = vmatpush1.msra.mxu0 %v537
  %539 = vmatprep.subr.mxu0 0.0
  %v540 = vand.u32 %v30, 4294901760
  %v541 = vsub.f32 %v30, %v540
  %v542 = vand.u32 %v541, 4294901760
  %543 = vmatpush1.msra.mxu0 %v542
  %544 = vmatprep.subr.mxu0 0.0
  %v545 = vand.u32 %v31, 4294901760
  %v546 = vsub.f32 %v31, %v545
  %v547 = vand.u32 %v546, 4294901760
  %548 = vmatpush1.msra.mxu0 %v547
  %549 = vmatprep.subr.mxu0 0.0
  %550 = vmatpush1.msra.mxu0 0.0
  %551 = vmatprep.subr.mxu0 0.0
  %552 = vmatpush1.msra.mxu0 0.0
  %553 = vmatprep.subr.mxu0 0.0
  %554 = vmatpush1.msra.mxu0 0.0
  %555 = vmatprep.subr.mxu0 0.0
  %556 = vmatpush1.msra.mxu0 0.0
  %557 = vmatprep.subr.mxu0 0.0
  %558 = vmatpush1.msra.mxu0 0.0
  %559 = vmatprep.subr.mxu0 0.0
  %560 = vmatpush1.msra.mxu0 0.0
  %561 = vmatprep.subr.mxu0 0.0
  %562 = vmatpush1.msra.mxu0 0.0
  %563 = vmatprep.subr.mxu0 0.0
  %564 = vmatpush1.msra.mxu0 0.0
  %565 = vmatprep.subr.mxu0 0.0
  %566 = vmatpush1.msra.mxu0 0.0
  %567 = vmatprep.subr.mxu0 0.0
  %568 = vmatpush1.msra.mxu0 0.0
  %569 = vmatprep.subr.mxu0 0.0
  %570 = vmatpush1.msra.mxu0 0.0
  %571 = vmatprep.subr.mxu0 0.0
  %572 = vmatpush1.msra.mxu0 0.0
  %573 = vmatprep.subr.mxu0 0.0
  %574 = vmatpush1.msra.mxu0 0.0
  %575 = vmatprep.subr.mxu0 0.0
  %576 = vmatpush1.msra.mxu0 0.0
  %577 = vmatprep.subr.mxu0 0.0
  %578 = vmatpush1.msra.mxu0 0.0
  %579 = vmatprep.subr.mxu0 0.0
  %580 = vmatpush1.msra.mxu0 0.0
  %581 = vmatprep.mubr.f32.mxu0 0.0
  %v582 = vand.u32 %v15, 4294901760
  %583 = vmatmul.mubr.f32.gmra.mrb[0].mxu0 %v582
  %v584 = vpop.f32.mrb[0].mxu0
  %v585 = vadd.f32 %v466, %v584
  %v586 = vpop.f32.mrb[0].mxu0
  %587 = vdwg.mxu0
  %588 = vmatprep.subr.mxu0 0.0
  %v589 = vand.u32 %v16, 4294901760
  %590 = vmatpush1.msra.mxu0 %v589
  %591 = vmatprep.subr.mxu0 0.0
  %v592 = vand.u32 %v17, 4294901760
  %593 = vmatpush1.msra.mxu0 %v592
  %594 = vmatprep.subr.mxu0 0.0
  %v595 = vand.u32 %v18, 4294901760
  %596 = vmatpush1.msra.mxu0 %v595
  %597 = vmatprep.subr.mxu0 0.0
  %v598 = vand.u32 %v19, 4294901760
  %599 = vmatpush1.msra.mxu0 %v598
  %600 = vmatprep.subr.mxu0 0.0
  %v601 = vand.u32 %v20, 4294901760
  %602 = vmatpush1.msra.mxu0 %v601
  %603 = vmatprep.subr.mxu0 0.0
  %v604 = vand.u32 %v21, 4294901760
  %605 = vmatpush1.msra.mxu0 %v604
  %606 = vmatprep.subr.mxu0 0.0
  %v607 = vand.u32 %v22, 4294901760
  %608 = vmatpush1.msra.mxu0 %v607
  %609 = vmatprep.subr.mxu0 0.0
  %v610 = vand.u32 %v23, 4294901760
  %611 = vmatpush1.msra.mxu0 %v610
  %612 = vmatprep.subr.mxu0 0.0
  %v613 = vand.u32 %v24, 4294901760
  %614 = vmatpush1.msra.mxu0 %v613
  %615 = vmatprep.subr.mxu0 0.0
  %v616 = vand.u32 %v25, 4294901760
  %617 = vmatpush1.msra.mxu0 %v616
  %618 = vmatprep.subr.mxu0 0.0
  %v619 = vand.u32 %v26, 4294901760
  %620 = vmatpush1.msra.mxu0 %v619
  %621 = vmatprep.subr.mxu0 0.0
  %v622 = vand.u32 %v27, 4294901760
  %623 = vmatpush1.msra.mxu0 %v622
  %624 = vmatprep.subr.mxu0 0.0
  %v625 = vand.u32 %v28, 4294901760
  %626 = vmatpush1.msra.mxu0 %v625
  %627 = vmatprep.subr.mxu0 0.0
  %v628 = vand.u32 %v29, 4294901760
  %629 = vmatpush1.msra.mxu0 %v628
  %630 = vmatprep.subr.mxu0 0.0
  %v631 = vand.u32 %v30, 4294901760
  %632 = vmatpush1.msra.mxu0 %v631
  %633 = vmatprep.subr.mxu0 0.0
  %v634 = vand.u32 %v31, 4294901760
  %635 = vmatpush1.msra.mxu0 %v634
  %636 = vmatprep.subr.mxu0 0.0
  %637 = vmatpush1.msra.mxu0 0.0
  %638 = vmatprep.subr.mxu0 0.0
  %639 = vmatpush1.msra.mxu0 0.0
  %640 = vmatprep.subr.mxu0 0.0
  %641 = vmatpush1.msra.mxu0 0.0
  %642 = vmatprep.subr.mxu0 0.0
  %643 = vmatpush1.msra.mxu0 0.0
  %644 = vmatprep.subr.mxu0 0.0
  %645 = vmatpush1.msra.mxu0 0.0
  %646 = vmatprep.subr.mxu0 0.0
  %647 = vmatpush1.msra.mxu0 0.0
  %648 = vmatprep.subr.mxu0 0.0
  %649 = vmatpush1.msra.mxu0 0.0
  %650 = vmatprep.subr.mxu0 0.0
  %651 = vmatpush1.msra.mxu0 0.0
  %652 = vmatprep.subr.mxu0 0.0
  %653 = vmatpush1.msra.mxu0 0.0
  %654 = vmatprep.subr.mxu0 0.0
  %655 = vmatpush1.msra.mxu0 0.0
  %656 = vmatprep.subr.mxu0 0.0
  %657 = vmatpush1.msra.mxu0 0.0
  %658 = vmatprep.subr.mxu0 0.0
  %659 = vmatpush1.msra.mxu0 0.0
  %660 = vmatprep.subr.mxu0 0.0
  %661 = vmatpush1.msra.mxu0 0.0
  %662 = vmatprep.subr.mxu0 0.0
  %663 = vmatpush1.msra.mxu0 0.0
  %664 = vmatprep.subr.mxu0 0.0
  %665 = vmatpush1.msra.mxu0 0.0
  %666 = vmatprep.subr.mxu0 0.0
  %667 = vmatpush1.msra.mxu0 0.0
  %668 = vmatprep.mubr.f32.mxu0 0.0
  %v669 = vand.u32 %v15, 4294901760
  %670 = vmatmul.mubr.f32.gmra.mrb[0].mxu0 %v669
  %v671 = vpop.f32.mrb[0].mxu0
  %v672 = vadd.f32 %v585, %v671
  %v673 = vpop.f32.mrb[0].mxu0
  %674 = vdwg.mxu0
  %vm675 = vcmask 31744
  %676 = vst.msk [vmem:[%s3] sm:$0xff] %vm675, %v672
  // Predicated region
  $region14: #{tpu_custom_call.1} parent=0 // pred_check
    _
  $region15: #{tpu_custom_call.1} parent=0 // pred_check_branch
    %678 = sbr.rel (0) target = $region17
  $region16: #{tpu_custom_call.1} parent=0 // pred_region
    _
  $region17: #{tpu_custom_call.1} parent=0 // pred_fallthru
    _
  // Predicated region
  $region18: #{tpu_custom_call.1} parent=0 // pred_check
    _
  $region19: #{tpu_custom_call.1} parent=0 // pred_check_branch
    %680 = sbr.rel (0) target = $region21
  $region20: #{tpu_custom_call.1} parent=0 // pred_region
    _
  $region21: #{tpu_custom_call.1} parent=0 // pred_fallthru
    _

</llo_original>
